<compile_context>
chip_gen: v6e
topology: v6e:2x2x1
jax: 0.10.0
libtpu: 0.0.40
codegen_flags: <defaults>
</compile_context>

<pallas_src>
import functools

import jax
import jax.numpy as jnp
from jax import lax
from jax.experimental import pallas as pl
from jax.experimental.pallas import tpu as pltpu


_LANES = 128
_SUB_MAX = 32                 # max rows per in-kernel compute sub-slab
_PIX_Q = 8 * _LANES           # 1024: pixel padding / chunk quantum (one vreg)


def _fold8(x):
    """(rows, 128) -> (8, 128) by summing 8-row groups (elementwise VPU adds)."""
    rows = x.shape[0]
    out = x[0:8]
    for g in range(1, rows // 8):
        out = out + x[g * 8:(g + 1) * 8]
    return out


def _ce2d_kernel(w_ref, pred_ref, tgt_ref, num_ref, den_ref, *,
                 hw, ignore_label, chunk, sub, inner_blocks):
    """One (batch, pixel-chunk) grid step.

    pred_ref/tgt_ref: (1, c, S, 128) VMEM blocks (classes on a short leading
    axis, pixels dense on sublanes x lanes).  w_ref: (c,) f32 in SMEM (scalar
    prefetch).  num_ref/den_ref: (1, 1, 8, 128) f32 accumulators, revisited
    across the 'arbitrary' inner grid axis.
    """
    o = pl.program_id(1)
    i = pl.program_id(2)

    @pl.when(i == 0)
    def _init():
        num_ref[...] = jnp.zeros_like(num_ref)
        den_ref[...] = jnp.zeros_like(den_ref)

    c = pred_ref.shape[1]
    s_rows = pred_ref.shape[2]
    n_sub = s_rows // sub

    blk = o * inner_blocks + i            # unclamped chunk id (for masking)
    base_pix = blk * chunk

    # Pixel offset of each (sublane, lane) element within one sub-slab.
    # Loop-invariant; hoisted out of the pl.loop body.
    loc = (lax.broadcasted_iota(jnp.int32, (sub, _LANES), 0) * _LANES
           + lax.broadcasted_iota(jnp.int32, (sub, _LANES), 1))

    @pl.loop(0, n_sub)
    def _(si):
        r0 = pl.multiple_of(si * sub, sub)
        rows = pl.ds(r0, sub)

        # ---- argmax of target over classes: unrolled elementwise loop.
        # Runs in the input dtype (bf16-native on v6e/v7x); strict '>' keeps
        # the first-max index, matching torch/jnp argmax tie behavior.
        best = tgt_ref[0, 0, rows, :]
        t = jnp.zeros((sub, _LANES), jnp.int32)
        for ci in range(1, c):
            v = tgt_ref[0, ci, rows, :]
            take = v > best
            best = jnp.where(take, v, best)
            t = jnp.where(take, ci, t)

        # ---- numerically stable log-softmax NLL at the target class (f32).
        m = pred_ref[0, 0, rows, :].astype(jnp.float32)
        for ci in range(1, c):
            m = jnp.maximum(m, pred_ref[0, ci, rows, :].astype(jnp.float32))
        se = jnp.zeros((sub, _LANES), jnp.float32)
        logit_t = jnp.zeros((sub, _LANES), jnp.float32)
        w_t = jnp.zeros((sub, _LANES), jnp.float32)
        for ci in range(c):
            li = pred_ref[0, ci, rows, :].astype(jnp.float32)
            se = se + jnp.exp(li - m)
            selc = t == ci
            logit_t = jnp.where(selc, li, logit_t)
            w_t = jnp.where(selc, w_ref[ci], w_t)    # SMEM scalar -> splat
        nll = m + jnp.log(se) - logit_t

        # ---- validity: in-bounds pixel (handles hw padding, partial blocks
        # and clamped duplicate blocks) and not the ignore label.  (t >= 0
        # always holds for argmax labels.)  jnp.where is a select, so NaN/Inf
        # from garbage pixels in partial blocks cannot leak into the sums.
        pix = base_pix + r0 * _LANES + loc
        valid = (pix < hw) & (t != ignore_label)

        num_c = jnp.where(valid, w_t * nll, 0.0)
        den_c = jnp.where(valid, w_t, 0.0)
        num_ref[0, 0] += _fold8(num_c)
        den_ref[0, 0] += _fold8(den_c)


def cross_entropy_2d(predict, target, weight, *, ignore_label=255,
                     size_average=True, chunk_pixels=None):
    """predict: (n, c, h, w) logits.  target: (n, c, h, w) score map (the
    module argmaxes it over channels).  weight: (c,) per-class weights.
    Returns a scalar f32 loss."""
    n, c, h, w_ = predict.shape
    assert target.shape == (n, c, h, w_)
    hw = h * w_

    pred_item = jnp.dtype(predict.dtype).itemsize
    tgt_item = jnp.dtype(target.dtype).itemsize

    # ---- Layout: NCHW -> (n, c, hw) is free; pad hw to a multiple of 1024
    # only when needed; -> (n, c, hw_pad/128, 128) is again free. ----
    hw_pad = -(-hw // _PIX_Q) * _PIX_Q
    pred3 = predict.reshape(n, c, hw)
    tgt3 = target.reshape(n, c, hw)
    if hw_pad != hw:
        pad = ((0, 0), (0, 0), (0, hw_pad - hw))
        pred3 = jnp.pad(pred3, pad)
        tgt3 = jnp.pad(tgt3, pad)
    s_total = hw_pad // _LANES
    pred4 = pred3.reshape(n, c, s_total, _LANES)
    tgt4 = tgt3.reshape(n, c, s_total, _LANES)
    w1 = weight.reshape(c).astype(jnp.float32)

    # ---- VMEM-budget-aware pixel chunk per grid step. ----
    try:
        vmem_cap = int(pltpu.get_tpu_info().vmem_capacity_bytes)
    except Exception:
        vmem_cap = 64 << 20                        # v7x worst case
    input_budget = min(vmem_cap // 4, 16 << 20)    # 2 inputs x 2 buffers
    if chunk_pixels is None:
        chunk = input_budget // (2 * c * (pred_item + tgt_item))
        # If that would swallow the whole image in one step, split it in two
        # so the DMA/compute pipeline has overlap and an odd/1-batch grid can
        # still be spread across a v7x megacore.
        if chunk >= hw_pad and hw_pad >= 2 * _PIX_Q:
            chunk = (hw_pad // 2 + _PIX_Q - 1) // _PIX_Q * _PIX_Q
    else:
        chunk = int(chunk_pixels)
    chunk = min(chunk, hw_pad)
    chunk = max(chunk // _PIX_Q * _PIX_Q, _PIX_Q)
    s_chunk = chunk // _LANES                      # sublane rows per block
    for sub in (_SUB_MAX, 16, 8):                  # compute sub-slab rows
        if s_chunk % sub == 0:
            break
    n_chunks = pl.cdiv(hw_pad, chunk)

    # Extra "parallel" split of the pixel range so a v7x megacore gets
    # balanced work when the batch axis alone is odd (incl. n == 1).  On
    # single-TC chips the cost is at most one fully masked duplicate block.
    outer = 2 if (n % 2 == 1 and n_chunks >= 2) else 1
    inner = pl.cdiv(n_chunks, outer)

    # Raise the scoped VMEM limit explicitly (v5e default is only 16 MiB) but
    # stay well under the chip's physical VMEM (v7x: 64 MiB).
    in_ws = 2 * c * chunk * (pred_item + tgt_item)      # double-buffered inputs
    vmem_limit = int(min(max(in_ws + (8 << 20), 16 << 20), vmem_cap // 2))

    kernel = functools.partial(
        _ce2d_kernel, hw=hw, ignore_label=ignore_label, chunk=chunk,
        sub=sub, inner_blocks=inner)

    def in_map(b, o, i, w_sref):
        del w_sref
        blk = o * inner + i
        return (b, 0, jnp.minimum(blk, n_chunks - 1), 0)

    def out_map(b, o, i, w_sref):
        del w_sref
        return (b, o, 0, 0)

    cost = pl.CostEstimate(
        flops=n * hw * (10 * c + 12),
        transcendentals=n * hw * (c + 1),
        bytes_accessed=(n * c * hw * (pred_item + tgt_item)
                        + 2 * n * outer * 8 * _LANES * 4 + c * 4))

    num_acc, den_acc = pl.pallas_call(
        kernel,
        out_shape=(jax.ShapeDtypeStruct((n, outer, 8, _LANES), jnp.float32),
                   jax.ShapeDtypeStruct((n, outer, 8, _LANES), jnp.float32)),
        grid_spec=pltpu.PrefetchScalarGridSpec(
            num_scalar_prefetch=1,
            grid=(n, outer, inner),
            in_specs=[pl.BlockSpec((1, c, s_chunk, _LANES), in_map),
                      pl.BlockSpec((1, c, s_chunk, _LANES), in_map)],
            out_specs=(pl.BlockSpec((1, 1, 8, _LANES), out_map),
                       pl.BlockSpec((1, 1, 8, _LANES), out_map)),
        ),
        compiler_params=pltpu.CompilerParams(
            dimension_semantics=("parallel", "parallel", "arbitrary"),
            vmem_limit_bytes=vmem_limit),
        cost_estimate=cost,
    )(w1, pred4, tgt4)

    num = jnp.sum(num_acc)
    den = jnp.sum(den_acc)
    if size_average:
        # The module returns zeros when there are no valid target pixels.
        return jnp.where(den > 0, num / jnp.maximum(den, 1e-30),
                         jnp.float32(0.0))
    return num


def _ref_loss(predict, target, weight, ignore_label=255):
    """Pure-JAX reference mirroring the PyTorch module (for sanity check)."""
    t = jnp.argmax(target, axis=1)                          # (n, h, w)
    mask = (t >= 0) & (t != ignore_label)
    logp = jax.nn.log_softmax(predict.astype(jnp.float32), axis=1)
    nll = -jnp.take_along_axis(logp, t[:, None], axis=1)[:, 0]
    wt = weight[t]
    num = jnp.sum(jnp.where(mask, wt * nll, 0.0))
    den = jnp.sum(jnp.where(mask, wt, 0.0))
    return num / den


if __name__ == "__main__":
    key = jax.random.PRNGKey(0)
    k1, k2, k3, k4 = jax.random.split(key, 4)

    # ---- Test 1: module-default weights, f32, even batch, single chunk
    # (hw=256 padded to 1024, fully masked beyond 256). ----
    n, c, h, w = 2, 4, 16, 16
    predict = jax.random.normal(k1, (n, c, h, w), dtype=jnp.float32)
    target = jax.random.normal(k2, (n, c, h, w), dtype=jnp.float32)
    weight = jnp.full((c,), 1.0 / c, dtype=jnp.float32)   # module default 1/C

    loss = jax.block_until_ready(
        cross_entropy_2d(predict, target, weight,
                         ignore_label=255, size_average=True))
    ref = jax.block_until_ready(_ref_loss(predict, target, weight))
    assert jnp.allclose(loss, ref, rtol=1e-5, atol=1e-5), (loss, ref)

    # ---- Test 2: bf16 inputs, non-uniform weights, odd batch (n=1) so the
    # pixel range is split across the extra parallel axis, small chunk so we
    # exercise multiple chunks, hw padding (2500 -> 3072), a chunk with only
    # partially valid pixels, and a clamped fully-masked duplicate block. ----
    n2, c2, h2, w2 = 1, 4, 25, 100
    p2 = jax.random.normal(k3, (n2, c2, h2, w2), dtype=jnp.float32)
    t2 = jax.random.normal(k4, (n2, c2, h2, w2), dtype=jnp.float32)
    p2 = p2.astype(jnp.bfloat16)
    t2 = t2.astype(jnp.bfloat16)
    w2arr = jnp.array([0.1, 0.4, 0.2, 0.3], dtype=jnp.float32)

    loss2 = jax.block_until_ready(
        cross_entropy_2d(p2, t2, w2arr, ignore_label=255,
                         size_average=True, chunk_pixels=1024))
    ref2 = jax.block_until_ready(_ref_loss(p2, t2, w2arr))
    assert jnp.allclose(loss2, ref2, rtol=1e-4, atol=1e-4), (loss2, ref2)

    print("KERNEL_OK")
</pallas_src>

<mosaic_0001>
module attributes {stable_mosaic.version = 11 : i64} {
  func.func @_ce2d_kernel(%arg0: i32, %arg1: i32, %arg2: i32, %arg3: memref<4xf32, #tpu.memory_space<smem>>, %arg4: memref<1x4x8x128xf32, #tpu.memory_space<vmem>>, %arg5: memref<1x4x8x128xf32, #tpu.memory_space<vmem>>, %arg6: memref<1x1x8x128xf32, #tpu.memory_space<vmem>>, %arg7: memref<1x1x8x128xf32, #tpu.memory_space<vmem>>) attributes {dimension_semantics = [#tpu.dimension_semantics<parallel>, #tpu.dimension_semantics<parallel>, #tpu.dimension_semantics<arbitrary>], iteration_bounds = array<i64: 2, 1, 1>, scalar_prefetch = 1 : i64, scratch_operands = 0 : i64, tpu.core_type = #tpu.core_type<tc>, window_params = [{transform_indices = @transform_0, window_bounds = array<i64: 1, 4, 8, 128>}, {transform_indices = @transform_1, window_bounds = array<i64: 1, 4, 8, 128>}, {transform_indices = @transform_2, window_bounds = array<i64: 1, 1, 8, 128>}, {transform_indices = @transform_3, window_bounds = array<i64: 1, 1, 8, 128>}]} {
    %c0_i32 = arith.constant 0 : i32
    %0 = arith.cmpi eq, %arg2, %c0_i32 : i32
    %1 = arith.extui %0 : i1 to i32
    %c0_i32_0 = arith.constant 0 : i32
    %2 = arith.cmpi ne, %1, %c0_i32_0 : i32
    scf.if %2 {
      %cst_68 = arith.constant 0.000000e+00 : f32
      %134 = vector.broadcast %cst_68 : f32 to vector<1x1x8x128xf32>
      %c0_69 = arith.constant 0 : index
      %c0_70 = arith.constant 0 : index
      %c0_71 = arith.constant 0 : index
      %c0_72 = arith.constant 0 : index
      %135 = vector.load %arg6[%c0_69, %c0_70, %c0_71, %c0_72] : memref<1x1x8x128xf32, #tpu.memory_space<vmem>>, vector<1x1x8x128xf32>
      tpu.vector_store %arg6[%c0_69, %c0_70, %c0_71, %c0_72], %134 {strides = array<i32>} : memref<1x1x8x128xf32, #tpu.memory_space<vmem>>, vector<1x1x8x128xf32>,
      %cst_73 = arith.constant 0.000000e+00 : f32
      %136 = vector.broadcast %cst_73 : f32 to vector<1x1x8x128xf32>
      %c0_74 = arith.constant 0 : index
      %c0_75 = arith.constant 0 : index
      %c0_76 = arith.constant 0 : index
      %c0_77 = arith.constant 0 : index
      %137 = vector.load %arg7[%c0_74, %c0_75, %c0_76, %c0_77] : memref<1x1x8x128xf32, #tpu.memory_space<vmem>>, vector<1x1x8x128xf32>
      tpu.vector_store %arg7[%c0_74, %c0_75, %c0_76, %c0_77], %136 {strides = array<i32>} : memref<1x1x8x128xf32, #tpu.memory_space<vmem>>, vector<1x1x8x128xf32>,
    } else {
    }
    %c1_i32 = arith.constant 1 : i32
    %3 = arith.muli %arg1, %c1_i32 : i32
    %4 = arith.addi %3, %arg2 : i32
    %c1024_i32 = arith.constant 1024 : i32
    %5 = arith.muli %4, %c1024_i32 : i32
    %6 = tpu.iota {dimensions = array<i32: 0>} : vector<8x128xi32>
    %c128_i32 = arith.constant 128 : i32
    %7 = vector.broadcast %c128_i32 : i32 to vector<8x128xi32>
    %8 = arith.muli %6, %7 : vector<8x128xi32>
    %9 = tpu.iota {dimensions = array<i32: 1>} : vector<8x128xi32>
    %10 = arith.addi %8, %9 : vector<8x128xi32>
    %c0_i32_1 = arith.constant 0 : i32
    %c1_i32_2 = arith.constant 1 : i32
    %11 = arith.muli %c0_i32_1, %c1_i32_2 : i32
    %c0_i32_3 = arith.constant 0 : i32
    %12 = arith.addi %c0_i32_3, %11 : i32
    %c8_i32 = arith.constant 8 : i32
    %13 = arith.muli %12, %c8_i32 : i32
    %14 = tpu.assume_multiple %13, 8 : i32
    %c0 = arith.constant 0 : index
    %c0_4 = arith.constant 0 : index
    %15 = arith.index_cast %14 : i32 to index
    %c0_5 = arith.constant 0 : index
    %16 = vector.load %arg5[%c0, %c0_4, %15, %c0_5] : memref<1x4x8x128xf32, #tpu.memory_space<vmem>>, vector<1x1x8x128xf32>
    %17 = vector.shape_cast %16 : vector<1x1x8x128xf32> to vector<8x128xf32>
    %c0_i32_6 = arith.constant 0 : i32
    %18 = vector.broadcast %c0_i32_6 : i32 to vector<8x128xi32>
    %c0_7 = arith.constant 0 : index
    %c1 = arith.constant 1 : index
    %19 = arith.index_cast %14 : i32 to index
    %c0_8 = arith.constant 0 : index
    %20 = vector.load %arg5[%c0_7, %c1, %19, %c0_8] : memref<1x4x8x128xf32, #tpu.memory_space<vmem>>, vector<1x1x8x128xf32>
    %21 = vector.shape_cast %20 : vector<1x1x8x128xf32> to vector<8x128xf32>
    %22 = arith.cmpf ogt, %21, %17 : vector<8x128xf32>
    %23 = arith.select %22, %21, %17 : vector<8x128xi1>, vector<8x128xf32>
    %c1_i32_9 = arith.constant 1 : i32
    %24 = vector.broadcast %c1_i32_9 : i32 to vector<8x128xi32>
    %25 = arith.select %22, %24, %18 : vector<8x128xi1>, vector<8x128xi32>
    %c0_10 = arith.constant 0 : index
    %c2 = arith.constant 2 : index
    %26 = arith.index_cast %14 : i32 to index
    %c0_11 = arith.constant 0 : index
    %27 = vector.load %arg5[%c0_10, %c2, %26, %c0_11] : memref<1x4x8x128xf32, #tpu.memory_space<vmem>>, vector<1x1x8x128xf32>
    %28 = vector.shape_cast %27 : vector<1x1x8x128xf32> to vector<8x128xf32>
    %29 = arith.cmpf ogt, %28, %23 : vector<8x128xf32>
    %30 = arith.select %29, %28, %23 : vector<8x128xi1>, vector<8x128xf32>
    %c2_i32 = arith.constant 2 : i32
    %31 = vector.broadcast %c2_i32 : i32 to vector<8x128xi32>
    %32 = arith.select %29, %31, %25 : vector<8x128xi1>, vector<8x128xi32>
    %c0_12 = arith.constant 0 : index
    %c3 = arith.constant 3 : index
    %33 = arith.index_cast %14 : i32 to index
    %c0_13 = arith.constant 0 : index
    %34 = vector.load %arg5[%c0_12, %c3, %33, %c0_13] : memref<1x4x8x128xf32, #tpu.memory_space<vmem>>, vector<1x1x8x128xf32>
    %35 = vector.shape_cast %34 : vector<1x1x8x128xf32> to vector<8x128xf32>
    %36 = arith.cmpf ogt, %35, %30 : vector<8x128xf32>
    %c3_i32 = arith.constant 3 : i32
    %37 = vector.broadcast %c3_i32 : i32 to vector<8x128xi32>
    %38 = arith.select %36, %37, %32 : vector<8x128xi1>, vector<8x128xi32>
    %c0_14 = arith.constant 0 : index
    %c0_15 = arith.constant 0 : index
    %39 = arith.index_cast %14 : i32 to index
    %c0_16 = arith.constant 0 : index
    %40 = vector.load %arg4[%c0_14, %c0_15, %39, %c0_16] : memref<1x4x8x128xf32, #tpu.memory_space<vmem>>, vector<1x1x8x128xf32>
    %41 = vector.shape_cast %40 : vector<1x1x8x128xf32> to vector<8x128xf32>
    %c0_17 = arith.constant 0 : index
    %c1_18 = arith.constant 1 : index
    %42 = arith.index_cast %14 : i32 to index
    %c0_19 = arith.constant 0 : index
    %43 = vector.load %arg4[%c0_17, %c1_18, %42, %c0_19] : memref<1x4x8x128xf32, #tpu.memory_space<vmem>>, vector<1x1x8x128xf32>
    %44 = vector.shape_cast %43 : vector<1x1x8x128xf32> to vector<8x128xf32>
    %45 = arith.maximumf %41, %44 : vector<8x128xf32>
    %c0_20 = arith.constant 0 : index
    %c2_21 = arith.constant 2 : index
    %46 = arith.index_cast %14 : i32 to index
    %c0_22 = arith.constant 0 : index
    %47 = vector.load %arg4[%c0_20, %c2_21, %46, %c0_22] : memref<1x4x8x128xf32, #tpu.memory_space<vmem>>, vector<1x1x8x128xf32>
    %48 = vector.shape_cast %47 : vector<1x1x8x128xf32> to vector<8x128xf32>
    %49 = arith.maximumf %45, %48 : vector<8x128xf32>
    %c0_23 = arith.constant 0 : index
    %c3_24 = arith.constant 3 : index
    %50 = arith.index_cast %14 : i32 to index
    %c0_25 = arith.constant 0 : index
    %51 = vector.load %arg4[%c0_23, %c3_24, %50, %c0_25] : memref<1x4x8x128xf32, #tpu.memory_space<vmem>>, vector<1x1x8x128xf32>
    %52 = vector.shape_cast %51 : vector<1x1x8x128xf32> to vector<8x128xf32>
    %53 = arith.maximumf %49, %52 : vector<8x128xf32>
    %cst = arith.constant 0.000000e+00 : f32
    %54 = vector.broadcast %cst : f32 to vector<8x128xf32>
    %cst_26 = arith.constant 0.000000e+00 : f32
    %55 = vector.broadcast %cst_26 : f32 to vector<8x128xf32>
    %cst_27 = arith.constant 0.000000e+00 : f32
    %56 = vector.broadcast %cst_27 : f32 to vector<8x128xf32>
    %c0_28 = arith.constant 0 : index
    %c0_29 = arith.constant 0 : index
    %57 = arith.index_cast %14 : i32 to index
    %c0_30 = arith.constant 0 : index
    %58 = vector.load %arg4[%c0_28, %c0_29, %57, %c0_30] : memref<1x4x8x128xf32, #tpu.memory_space<vmem>>, vector<1x1x8x128xf32>
    %59 = vector.shape_cast %58 : vector<1x1x8x128xf32> to vector<8x128xf32>
    %60 = arith.subf %59, %53 : vector<8x128xf32>
    %61 = math.exp %60 : vector<8x128xf32>
    %62 = arith.addf %54, %61 : vector<8x128xf32>
    %c0_i32_31 = arith.constant 0 : i32
    %63 = vector.broadcast %c0_i32_31 : i32 to vector<8x128xi32>
    %64 = arith.cmpi eq, %38, %63 : vector<8x128xi32>
    %65 = arith.select %64, %59, %55 : vector<8x128xi1>, vector<8x128xf32>
    %c0_32 = arith.constant 0 : index
    %66 = memref.load %arg3[%c0_32] : memref<4xf32, #tpu.memory_space<smem>>
    %67 = vector.broadcast %66 : f32 to vector<8x128xf32>
    %68 = arith.select %64, %67, %56 : vector<8x128xi1>, vector<8x128xf32>
    %c0_33 = arith.constant 0 : index
    %c1_34 = arith.constant 1 : index
    %69 = arith.index_cast %14 : i32 to index
    %c0_35 = arith.constant 0 : index
    %70 = vector.load %arg4[%c0_33, %c1_34, %69, %c0_35] : memref<1x4x8x128xf32, #tpu.memory_space<vmem>>, vector<1x1x8x128xf32>
    %71 = vector.shape_cast %70 : vector<1x1x8x128xf32> to vector<8x128xf32>
    %72 = arith.subf %71, %53 : vector<8x128xf32>
    %73 = math.exp %72 : vector<8x128xf32>
    %74 = arith.addf %62, %73 : vector<8x128xf32>
    %c1_i32_36 = arith.constant 1 : i32
    %75 = vector.broadcast %c1_i32_36 : i32 to vector<8x128xi32>
    %76 = arith.cmpi eq, %38, %75 : vector<8x128xi32>
    %77 = arith.select %76, %71, %65 : vector<8x128xi1>, vector<8x128xf32>
    %c1_37 = arith.constant 1 : index
    %78 = memref.load %arg3[%c1_37] : memref<4xf32, #tpu.memory_space<smem>>
    %79 = vector.broadcast %78 : f32 to vector<8x128xf32>
    %80 = arith.select %76, %79, %68 : vector<8x128xi1>, vector<8x128xf32>
    %c0_38 = arith.constant 0 : index
    %c2_39 = arith.constant 2 : index
    %81 = arith.index_cast %14 : i32 to index
    %c0_40 = arith.constant 0 : index
    %82 = vector.load %arg4[%c0_38, %c2_39, %81, %c0_40] : memref<1x4x8x128xf32, #tpu.memory_space<vmem>>, vector<1x1x8x128xf32>
    %83 = vector.shape_cast %82 : vector<1x1x8x128xf32> to vector<8x128xf32>
    %84 = arith.subf %83, %53 : vector<8x128xf32>
    %85 = math.exp %84 : vector<8x128xf32>
    %86 = arith.addf %74, %85 : vector<8x128xf32>
    %c2_i32_41 = arith.constant 2 : i32
    %87 = vector.broadcast %c2_i32_41 : i32 to vector<8x128xi32>
    %88 = arith.cmpi eq, %38, %87 : vector<8x128xi32>
    %89 = arith.select %88, %83, %77 : vector<8x128xi1>, vector<8x128xf32>
    %c2_42 = arith.constant 2 : index
    %90 = memref.load %arg3[%c2_42] : memref<4xf32, #tpu.memory_space<smem>>
    %91 = vector.broadcast %90 : f32 to vector<8x128xf32>
    %92 = arith.select %88, %91, %80 : vector<8x128xi1>, vector<8x128xf32>
    %c0_43 = arith.constant 0 : index
    %c3_44 = arith.constant 3 : index
    %93 = arith.index_cast %14 : i32 to index
    %c0_45 = arith.constant 0 : index
    %94 = vector.load %arg4[%c0_43, %c3_44, %93, %c0_45] : memref<1x4x8x128xf32, #tpu.memory_space<vmem>>, vector<1x1x8x128xf32>
    %95 = vector.shape_cast %94 : vector<1x1x8x128xf32> to vector<8x128xf32>
    %96 = arith.subf %95, %53 : vector<8x128xf32>
    %97 = math.exp %96 : vector<8x128xf32>
    %98 = arith.addf %86, %97 : vector<8x128xf32>
    %c3_i32_46 = arith.constant 3 : i32
    %99 = vector.broadcast %c3_i32_46 : i32 to vector<8x128xi32>
    %100 = arith.cmpi eq, %38, %99 : vector<8x128xi32>
    %101 = arith.select %100, %95, %89 : vector<8x128xi1>, vector<8x128xf32>
    %c3_47 = arith.constant 3 : index
    %102 = memref.load %arg3[%c3_47] : memref<4xf32, #tpu.memory_space<smem>>
    %103 = vector.broadcast %102 : f32 to vector<8x128xf32>
    %104 = arith.select %100, %103, %92 : vector<8x128xi1>, vector<8x128xf32>
    %105 = math.log %98 : vector<8x128xf32>
    %106 = arith.addf %53, %105 : vector<8x128xf32>
    %107 = arith.subf %106, %101 : vector<8x128xf32>
    %c128_i32_48 = arith.constant 128 : i32
    %108 = arith.muli %14, %c128_i32_48 : i32
    %109 = arith.addi %5, %108 : i32
    %110 = vector.broadcast %109 : i32 to vector<8x128xi32>
    %111 = arith.addi %110, %10 : vector<8x128xi32>
    %c256_i32 = arith.constant 256 : i32
    %112 = vector.broadcast %c256_i32 : i32 to vector<8x128xi32>
    %113 = arith.cmpi slt, %111, %112 : vector<8x128xi32>
    %c255_i32 = arith.constant 255 : i32
    %114 = vector.broadcast %c255_i32 : i32 to vector<8x128xi32>
    %115 = arith.cmpi ne, %38, %114 : vector<8x128xi32>
    %116 = arith.andi %113, %115 : vector<8x128xi1>
    %117 = arith.mulf %104, %107 : vector<8x128xf32>
    %cst_49 = arith.constant 0.000000e+00 : f32
    %118 = vector.broadcast %cst_49 : f32 to vector<8x128xf32>
    %119 = arith.select %116, %117, %118 : vector<8x128xi1>, vector<8x128xf32>
    %cst_50 = arith.constant 0.000000e+00 : f32
    %120 = vector.broadcast %cst_50 : f32 to vector<8x128xf32>
    %121 = arith.select %116, %104, %120 : vector<8x128xi1>, vector<8x128xf32>
    %c0_51 = arith.constant 0 : index
    %c0_52 = arith.constant 0 : index
    %c0_53 = arith.constant 0 : index
    %c0_54 = arith.constant 0 : index
    %122 = vector.load %arg6[%c0_51, %c0_52, %c0_53, %c0_54] : memref<1x1x8x128xf32, #tpu.memory_space<vmem>>, vector<1x1x8x128xf32>
    %123 = vector.shape_cast %122 : vector<1x1x8x128xf32> to vector<8x128xf32>
    %124 = arith.addf %123, %119 : vector<8x128xf32>
    %c0_55 = arith.constant 0 : index
    %c0_56 = arith.constant 0 : index
    %c0_57 = arith.constant 0 : index
    %c0_58 = arith.constant 0 : index
    %125 = vector.load %arg6[%c0_55, %c0_56, %c0_57, %c0_58] : memref<1x1x8x128xf32, #tpu.memory_space<vmem>>, vector<1x1x8x128xf32>
    %126 = vector.shape_cast %125 : vector<1x1x8x128xf32> to vector<8x128xf32>
    %127 = vector.shape_cast %124 : vector<8x128xf32> to vector<1x1x8x128xf32>
    tpu.vector_store %arg6[%c0_55, %c0_56, %c0_57, %c0_58], %127 {strides = array<i32>} : memref<1x1x8x128xf32, #tpu.memory_space<vmem>>, vector<1x1x8x128xf32>,
    %c0_59 = arith.constant 0 : index
    %c0_60 = arith.constant 0 : index
    %c0_61 = arith.constant 0 : index
    %c0_62 = arith.constant 0 : index
    %128 = vector.load %arg7[%c0_59, %c0_60, %c0_61, %c0_62] : memref<1x1x8x128xf32, #tpu.memory_space<vmem>>, vector<1x1x8x128xf32>
    %129 = vector.shape_cast %128 : vector<1x1x8x128xf32> to vector<8x128xf32>
    %130 = arith.addf %129, %121 : vector<8x128xf32>
    %c0_63 = arith.constant 0 : index
    %c0_64 = arith.constant 0 : index
    %c0_65 = arith.constant 0 : index
    %c0_66 = arith.constant 0 : index
    %131 = vector.load %arg7[%c0_63, %c0_64, %c0_65, %c0_66] : memref<1x1x8x128xf32, #tpu.memory_space<vmem>>, vector<1x1x8x128xf32>
    %132 = vector.shape_cast %131 : vector<1x1x8x128xf32> to vector<8x128xf32>
    %133 = vector.shape_cast %130 : vector<8x128xf32> to vector<1x1x8x128xf32>
    tpu.vector_store %arg7[%c0_63, %c0_64, %c0_65, %c0_66], %133 {strides = array<i32>} : memref<1x1x8x128xf32, #tpu.memory_space<vmem>>, vector<1x1x8x128xf32>,
    %c1_i32_67 = arith.constant 1 : i32
    return
  }
  func.func @transform_0(%arg0: i32, %arg1: i32, %arg2: i32, %arg3: memref<4xf32, #tpu.memory_space<smem>>) -> (i32, i32, i32, i32) {
    %c1_i32 = arith.constant 1 : i32
    %0 = arith.muli %arg1, %c1_i32 : i32
    %1 = arith.addi %0, %arg2 : i32
    %c0_i32 = arith.constant 0 : i32
    %2 = arith.minsi %1, %c0_i32 : i32
    %c0_i32_0 = arith.constant 0 : i32
    %c0_i32_1 = arith.constant 0 : i32
    %c0_i32_2 = arith.constant 0 : i32
    return %arg0, %c0_i32_0, %2, %c0_i32_1 : i32, i32, i32, i32
  }
  func.func @transform_1(%arg0: i32, %arg1: i32, %arg2: i32, %arg3: memref<4xf32, #tpu.memory_space<smem>>) -> (i32, i32, i32, i32) {
    %c1_i32 = arith.constant 1 : i32
    %0 = arith.muli %arg1, %c1_i32 : i32
    %1 = arith.addi %0, %arg2 : i32
    %c0_i32 = arith.constant 0 : i32
    %2 = arith.minsi %1, %c0_i32 : i32
    %c0_i32_0 = arith.constant 0 : i32
    %c0_i32_1 = arith.constant 0 : i32
    %c0_i32_2 = arith.constant 0 : i32
    return %arg0, %c0_i32_0, %2, %c0_i32_1 : i32, i32, i32, i32
  }
  func.func @transform_2(%arg0: i32, %arg1: i32, %arg2: i32, %arg3: memref<4xf32, #tpu.memory_space<smem>>) -> (i32, i32, i32, i32) {
    %c0_i32 = arith.constant 0 : i32
    %c0_i32_0 = arith.constant 0 : i32
    %c0_i32_1 = arith.constant 0 : i32
    return %arg0, %arg1, %c0_i32, %c0_i32_0 : i32, i32, i32, i32
  }
  func.func @transform_3(%arg0: i32, %arg1: i32, %arg2: i32, %arg3: memref<4xf32, #tpu.memory_space<smem>>) -> (i32, i32, i32, i32) {
    %c0_i32 = arith.constant 0 : i32
    %c0_i32_0 = arith.constant 0 : i32
    %c0_i32_1 = arith.constant 0 : i32
    return %arg0, %arg1, %c0_i32, %c0_i32_0 : i32, i32, i32, i32
  }
}

</mosaic_0001>

<llo_original>
// kernel: tpu_custom_call.1
$region0: #{tpu_custom_call.1}
  #allocation0 [shape = 'u32[]', space=smem, size = 0x4, offset = 0x4, fixed_abs, tag = 'smem constant byte address 0x4 - core index']
  #allocation1 [shape = 'u32[144,128]{1,0:T(1,128)}', space=vmem, size = 0x12000, scoped, tag = 'internal scratch']
  #allocation2 [shape = 's32[1]{0}', space=sflag, size = 0x4, scoped, tag = 'scoped memory for tpu_custom_call.1']
  #allocation3 [shape = 'u8[512]{0}', space=smem, size = 0x200, scoped, tag = 'prefetched SMEM operand 0']
  %s0 = inlined_call_operand.hbm [shape: f32[4], index: 0, kind: input, shape index: {}]
  %s1 = inlined_call_operand.hbm [shape: f32[2,4,8,128], index: 1, kind: input, shape index: {}]
  %s2 = inlined_call_operand.hbm [shape: f32[2,4,8,128], index: 2, kind: input, shape index: {}]
  %s3 = inlined_call_operand.hbm [shape: f32[2,1,8,128], index: 3, kind: output, shape index: {0}]
  %s4 = inlined_call_operand.hbm [shape: f32[2,1,8,128], index: 4, kind: output, shape index: {1}]
  %5 = xla_tuple %s3, %s4
  %s6 = sld [smem:[#allocation0]]
  $region61: #{tpu_custom_call.1} parent=0
    _
  %s8 = ssub.s32 1, %s6
  %s9 = scalar_select 0, %s8, %s6
  %11 = dma.hbm_to_smem %s0, 16, [#allocation3], [#allocation2]
  %12 = dma.done [#allocation2], 16
  %13 = sfence
  $region1: #{tpu_custom_call.1} parent=0
    #allocation4 [shape = 'u8[32768]{0}', space=vmem, size = 0x8000, scoped, tag = 'input window, operand 1']
    #allocation5 [shape = 's32[2]{0}', space=sflag, size = 0x8, scoped, tag = 'scoped memory for tpu_custom_call.1']
    #allocation6 [shape = 's32[2]{0}', space=sflag, size = 0x8, scoped, tag = 'scoped memory for tpu_custom_call.1']
    #allocation7 [shape = 'u8[32768]{0}', space=vmem, size = 0x8000, scoped, tag = 'input window, operand 2']
    #allocation8 [shape = 's32[2]{0}', space=sflag, size = 0x8, scoped, tag = 'scoped memory for tpu_custom_call.1']
    #allocation9 [shape = 'u8[8192]{0}', space=vmem, size = 0x2000, scoped, tag = 'output window, operand 0']
    #allocation10 [shape = 'u8[8192]{0}', space=vmem, size = 0x2000, scoped, tag = 'output window, operand 1']
    #allocation11 [shape = 's32[2]{0}', space=sflag, size = 0x8, scoped, tag = 'scoped memory for tpu_custom_call.1']
    %14 = vsyncpa [#allocation5], 0
    %s15 = scalar_lea.sflag [#allocation5], 1
    %16 = vsyncpa %s15, 0
    %17 = vsyncpa [#allocation8], 0
    %s18 = scalar_lea.sflag [#allocation8], 1
    %19 = vsyncpa %s18, 0
    %20 = vsyncpa [#allocation6], 0
    %s21 = scalar_lea.sflag [#allocation6], 1
    %22 = vsyncpa %s21, 0
    %23 = vsyncpa [#allocation11], 0
    %s24 = scalar_lea.sflag [#allocation11], 1
    %25 = vsyncpa %s24, 0
    loop: start=0, step=1, limit=4
    $region2: #{tpu_custom_call.1} parent=1 // loop_pre_header
      _
    $region3: #{tpu_custom_call.1} parent=1 // loop_header
      %s27 = sphi 0, %s31
      %p28 = scmp.ge.s32.totalorder %s27, 4
      %s34 = sphi 0, %s53
      %s35 = sphi 0, %s49
      %s36 = sphi 0, %s45
      %s37 = sphi 0, %s34
      %s38 = sphi 0, %s35
      %s39 = sphi 0, %s36
      %s40 = sphi 0, %s37
      %s41 = sphi 0, %s38
      %s42 = sphi 0, %s39
      %s64 = sphi 0, %s66
      %s67 = sphi 0, %s64
      %s68 = sphi 0, %s67
      %s84 = sphi 0, %s68
      %s98 = sphi 0, %s100
      %s101 = sphi 0, %s98
      %s102 = sphi 0, %s101
      %s118 = sphi 0, %s102
      %s126 = sphi 0, %s128
      %s129 = sphi 0, %s126
      %s130 = sphi 0, %s129
      %s146 = sphi 0, %s130
      %s154 = sphi 0, %s156
      %s157 = sphi 0, %s154
      %s158 = sphi 0, %s157
      %s174 = sphi 0, %s158
    $region4: #{tpu_custom_call.1} parent=1 // loop_header_branch
      %30 = sbr.rel (%p28) target = $region8
    $region5: #{tpu_custom_call.1} parent=1 // loop_body
      %s32 = ssub.s32 %s27, 1
      %s33 = ssub.s32 %s27, 2
      %s43 = sadd.s32 1, %s36
      %p44 = scmp.ge.s32.totalorder %s43, 1
      %s45 = scalar_select %p44, 0, %s43
      %s46 = sadd.s32 1, %s35
      %s47 = scalar_select %p44, %s46, %s35
      %p48 = scmp.ge.s32.totalorder %s47, 1
      %s49 = scalar_select %p48, 0, %s47
      %s50 = sadd.s32 1, %s34
      %s51 = scalar_select %p48, %s50, %s34
      %p52 = scmp.ge.s32.totalorder %s51, 2
      %s53 = scalar_select %p52, 0, %s51
      %s54 = sadd.s32 %s35, %s36
      %p55 = scmp.lt.s32.totalorder %s54, 0
      %s56 = scalar_select %p55, %s54, 0
      %s57 = sadd.s32 %s49, %s45
      %p58 = scmp.lt.s32.totalorder %s57, 0
      %s59 = scalar_select %p58, %s57, 0
      %s60 = ssub.s32 %s34, %s53
      %s61 = ssub.s32 %s56, %s59
      %s62 = sor.u32 %s60, %s61
      %p63 = scmp.eq.s32.totalorder %s62, 0
      %s65 = sadd.s32 %s64, 1
      %s66 = scalar_select %p63, %s64, %s65
      %p69 = pneg %p63
      %p70 = scmp.eq.s32.totalorder %s27, 1
      %p71 = por %p69, %p70
      %p72 = scmp.ne.s32.totalorder %s64, %s67
      %p73 = scmp.eq.s32.totalorder %s27, 0
      %p74 = por %p72, %p73
      %p75 = scmp.ne.s32.totalorder %s64, %s67
      %p76 = scmp.eq.s32.totalorder %s32, 1
      %p77 = por %p75, %p76
      %p78 = scmp.ne.s32.totalorder %s67, %s68
      %p79 = scmp.eq.s32.totalorder %s32, 0
      %p80 = por %p78, %p79
      %p81 = scmp.ne.s32.totalorder %s67, %s68
      %p82 = scmp.eq.s32.totalorder %s33, 1
      %p83 = por %p81, %p82
      %p85 = scmp.ne.s32.totalorder %s68, %s84
      %p86 = scmp.eq.s32.totalorder %s33, 0
      %p87 = por %p85, %p86
      %s88 = sadd.s32 %s35, %s36
      %p89 = scmp.lt.s32.totalorder %s88, 0
      %s90 = scalar_select %p89, %s88, 0
      %s91 = sadd.s32 %s49, %s45
      %p92 = scmp.lt.s32.totalorder %s91, 0
      %s93 = scalar_select %p92, %s91, 0
      %s94 = ssub.s32 %s34, %s53
      %s95 = ssub.s32 %s90, %s93
      %s96 = sor.u32 %s94, %s95
      %p97 = scmp.eq.s32.totalorder %s96, 0
      %s99 = sadd.s32 %s98, 1
      %s100 = scalar_select %p97, %s98, %s99
      %p103 = pneg %p97
      %p104 = scmp.eq.s32.totalorder %s27, 1
      %p105 = por %p103, %p104
      %p106 = scmp.ne.s32.totalorder %s98, %s101
      %p107 = scmp.eq.s32.totalorder %s27, 0
      %p108 = por %p106, %p107
      %p109 = scmp.ne.s32.totalorder %s98, %s101
      %p110 = scmp.eq.s32.totalorder %s32, 1
      %p111 = por %p109, %p110
      %p112 = scmp.ne.s32.totalorder %s101, %s102
      %p113 = scmp.eq.s32.totalorder %s32, 0
      %p114 = por %p112, %p113
      %p115 = scmp.ne.s32.totalorder %s101, %s102
      %p116 = scmp.eq.s32.totalorder %s33, 1
      %p117 = por %p115, %p116
      %p119 = scmp.ne.s32.totalorder %s102, %s118
      %p120 = scmp.eq.s32.totalorder %s33, 0
      %p121 = por %p119, %p120
      %s122 = ssub.s32 %s34, %s53
      %s123 = ssub.s32 %s35, %s49
      %s124 = sor.u32 %s122, %s123
      %p125 = scmp.eq.s32.totalorder %s124, 0
      %s127 = sadd.s32 %s126, 1
      %s128 = scalar_select %p125, %s126, %s127
      %p131 = pneg %p125
      %p132 = scmp.eq.s32.totalorder %s27, 1
      %p133 = por %p131, %p132
      %p134 = scmp.ne.s32.totalorder %s126, %s129
      %p135 = scmp.eq.s32.totalorder %s27, 0
      %p136 = por %p134, %p135
      %p137 = scmp.ne.s32.totalorder %s126, %s129
      %p138 = scmp.eq.s32.totalorder %s32, 1
      %p139 = por %p137, %p138
      %p140 = scmp.ne.s32.totalorder %s129, %s130
      %p141 = scmp.eq.s32.totalorder %s32, 0
      %p142 = por %p140, %p141
      %p143 = scmp.ne.s32.totalorder %s129, %s130
      %p144 = scmp.eq.s32.totalorder %s33, 1
      %p145 = por %p143, %p144
      %p147 = scmp.ne.s32.totalorder %s130, %s146
      %p148 = scmp.eq.s32.totalorder %s33, 0
      %p149 = por %p147, %p148
      %s150 = ssub.s32 %s34, %s53
      %s151 = ssub.s32 %s35, %s49
      %s152 = sor.u32 %s150, %s151
      %p153 = scmp.eq.s32.totalorder %s152, 0
      %s155 = sadd.s32 %s154, 1
      %s156 = scalar_select %p153, %s154, %s155
      %p159 = pneg %p153
      %p160 = scmp.eq.s32.totalorder %s27, 1
      %p161 = por %p159, %p160
      %p162 = scmp.ne.s32.totalorder %s154, %s157
      %p163 = scmp.eq.s32.totalorder %s27, 0
      %p164 = por %p162, %p163
      %p165 = scmp.ne.s32.totalorder %s154, %s157
      %p166 = scmp.eq.s32.totalorder %s32, 1
      %p167 = por %p165, %p166
      %p168 = scmp.ne.s32.totalorder %s157, %s158
      %p169 = scmp.eq.s32.totalorder %s32, 0
      %p170 = por %p168, %p169
      %p171 = scmp.ne.s32.totalorder %s157, %s158
      %p172 = scmp.eq.s32.totalorder %s33, 1
      %p173 = por %p171, %p172
      %p175 = scmp.ne.s32.totalorder %s158, %s174
      %p176 = scmp.eq.s32.totalorder %s33, 0
      %p177 = por %p175, %p176
      %p178 = scmp.le.s32.totalorder 1, %s27
      %p179 = scmp.lt.s32.totalorder %s27, 3
      %p180 = pnand %p178, %p179
      %p181 = pneg %p180
      // Predicated region
      $region9: #{tpu_custom_call.1} parent=5 // pred_check
        _
      $region10: #{tpu_custom_call.1} parent=5 // pred_check_branch
        %183 = sbr.rel (%p180) target = $region12
      $region11: #{tpu_custom_call.1} parent=5 // pred_region
        %s184 = ssub.s32 %s27, 1
      $region12: #{tpu_custom_call.1} parent=5 // pred_fallthru
        _
      %p185 = scmp.lt.s32.totalorder %s27, 2
      // Predicated region
      $region13: #{tpu_custom_call.1} parent=5 // pred_check
        %p186 = pneg %p185
      $region14: #{tpu_custom_call.1} parent=5 // pred_check_branch
        %188 = sbr.rel (%p186) target = $region16
      $region15: #{tpu_custom_call.1} parent=5 // pred_region
        // Predicated region
        $region17: #{tpu_custom_call.1} parent=15 // pred_check
          %p189 = pneg %p74
        $region18: #{tpu_custom_call.1} parent=15 // pred_check_branch
          %191 = sbr.rel (%p189) target = $region20
        $region19: #{tpu_custom_call.1} parent=15 // pred_region
          %s192 = sand.u32 %s64, 1
          %s193 = scalar_lea.sflag [#allocation5], %s192
          %s194 = sand.u32 %s64, 1
          %s195 = smul.addr %s194, 32
          %s196 = scalar_lea.vmem [#allocation4], %s195
          %s197 = sadd.s32 %s35, %s36
          %p198 = scmp.lt.s32.totalorder %s197, 0
          %s199 = scalar_select %p198, %s197, 0
          %s201 = ssub.s32 512, 512
          %202 = vsyncadd %s193, %s201
          %s203 = smul.addr %s34, 4
          %s204 = sadd.s32 %s199, %s203
          %s205 = smul.addr %s204, 128
          %s206 = scalar_lea.hbm %s1, %s205
          %s207 = sshll.u32 %s196, 4
          %s208 = int_to_ptr.vmem [resolvable:$true] %s207
          %213 = dma.hbm_to_vmem [thread:$0]  %s206, 512, %s208, %s193, 128, 128, 8
        $region20: #{tpu_custom_call.1} parent=15 // pred_fallthru
          _
        // Predicated region
        $region21: #{tpu_custom_call.1} parent=15 // pred_check
          %p214 = pneg %p108
        $region22: #{tpu_custom_call.1} parent=15 // pred_check_branch
          %216 = sbr.rel (%p214) target = $region24
        $region23: #{tpu_custom_call.1} parent=15 // pred_region
          %s217 = sand.u32 %s98, 1
          %s218 = scalar_lea.sflag [#allocation8], %s217
          %s219 = sand.u32 %s98, 1
          %s220 = smul.addr %s219, 32
          %s221 = scalar_lea.vmem [#allocation7], %s220
          %s222 = sadd.s32 %s35, %s36
          %p223 = scmp.lt.s32.totalorder %s222, 0
          %s224 = scalar_select %p223, %s222, 0
          %s226 = ssub.s32 512, 512
          %227 = vsyncadd %s218, %s226
          %s228 = smul.addr %s34, 4
          %s229 = sadd.s32 %s224, %s228
          %s230 = smul.addr %s229, 128
          %s231 = scalar_lea.hbm %s2, %s230
          %s232 = sshll.u32 %s221, 4
          %s233 = int_to_ptr.vmem [resolvable:$true] %s232
          %238 = dma.hbm_to_vmem [thread:$0]  %s231, 512, %s233, %s218, 128, 128, 8
        $region24: #{tpu_custom_call.1} parent=15 // pred_fallthru
          _
      $region16: #{tpu_custom_call.1} parent=5 // pred_fallthru
        _
      %p239 = scmp.le.s32.totalorder 1, %s27
      %p240 = scmp.lt.s32.totalorder %s27, 3
      %p241 = pnand %p239, %p240
      %p242 = pneg %p241
      // Predicated region
      $region25: #{tpu_custom_call.1} parent=5 // pred_check
        _
      $region26: #{tpu_custom_call.1} parent=5 // pred_check_branch
        %244 = sbr.rel (%p241) target = $region28
      $region27: #{tpu_custom_call.1} parent=5 // pred_region
        %s245 = ssub.s32 %s27, 1
        %s246 = sand.u32 %s67, 1
        %s247 = scalar_lea.sflag [#allocation5], %s246
        %s248 = sand.u32 %s67, 1
        %s249 = smul.addr %s248, 32
        %s250 = scalar_lea.vmem [#allocation4], %s249
        // Predicated region
        $region29: #{tpu_custom_call.1} parent=27 // pred_check
          %p251 = pneg %p80
        $region30: #{tpu_custom_call.1} parent=27 // pred_check_branch
          %253 = sbr.rel (%p251) target = $region32
        $region31: #{tpu_custom_call.1} parent=27 // pred_region
          %254 = dma.done %s247, 512
        $region32: #{tpu_custom_call.1} parent=27 // pred_fallthru
          _
        %s255 = sand.u32 %s101, 1
        %s256 = scalar_lea.sflag [#allocation8], %s255
        %s257 = sand.u32 %s101, 1
        %s258 = smul.addr %s257, 32
        %s259 = scalar_lea.vmem [#allocation7], %s258
        // Predicated region
        $region33: #{tpu_custom_call.1} parent=27 // pred_check
          %p260 = pneg %p114
        $region34: #{tpu_custom_call.1} parent=27 // pred_check_branch
          %262 = sbr.rel (%p260) target = $region36
        $region35: #{tpu_custom_call.1} parent=27 // pred_region
          %263 = dma.done %s256, 512
        $region36: #{tpu_custom_call.1} parent=27 // pred_fallthru
          _
        %s264 = sand.u32 %s67, 1
        %s265 = scalar_lea.sflag [#allocation5], %s264
        %s266 = sand.u32 %s67, 1
        %s267 = smul.addr %s266, 32
        %s268 = scalar_lea.vmem [#allocation4], %s267
        %p269 = pneg %p80
        %p270 = pneg %p77
        %s271 = sand.u32 %s101, 1
        %s272 = scalar_lea.sflag [#allocation8], %s271
        %s273 = sand.u32 %s101, 1
        %s274 = smul.addr %s273, 32
        %s275 = scalar_lea.vmem [#allocation7], %s274
        %p276 = pneg %p114
        %p277 = pneg %p111
        %p278 = pneg %p142
        %p279 = pneg %p139
        %s280 = sand.u32 %s129, 1
        %s281 = scalar_lea.sflag [#allocation6], %s280
        %s282 = sand.u32 %s129, 1
        %s283 = smul.addr %s282, 8
        %s284 = scalar_lea.vmem [#allocation9], %s283
        %p285 = pneg %p170
        %p286 = pneg %p167
        %s287 = sand.u32 %s157, 1
        %s288 = scalar_lea.sflag [#allocation11], %s287
        %s289 = sand.u32 %s157, 1
        %s290 = smul.addr %s289, 8
        %s291 = scalar_lea.vmem [#allocation10], %s290
        %s292 = sadd.s32 %s38, %s39
        %p293 = scmp.lt.s32.totalorder %s292, 0
        %s294 = scalar_select %p293, %s292, 0
        %s295 = sadd.s32 %s38, %s39
        %p296 = scmp.lt.s32.totalorder %s295, 0
        %s297 = scalar_select %p296, %s295, 0
        %p298 = scmp.eq.s32.totalorder %s39, 0
        // Predicated region
        $region37: #{tpu_custom_call.1} parent=27 // pred_check
          %p299 = pneg %p298
        $region38: #{tpu_custom_call.1} parent=27 // pred_check_branch
          %301 = sbr.rel (%p299) target = $region40
        $region39: #{tpu_custom_call.1} parent=27 // pred_region
          %302 = vst [vmem:[%s284] sm:$0xff] 0.0
          %303 = vst [vmem:[%s291] sm:$0xff] 0.0
        $region40: #{tpu_custom_call.1} parent=27 // pred_fallthru
          _
        %s304 = sadd.s32 %s38, %s39
        %s305 = smul.u32 %s304, 1024
        %v306 = vlaneseq
        %v307 = vshrl.u32 %v306, 7
        %v308 = vmul.u32 %v307, 128
        %v309 = vlaneseq
        %v310 = vand.u32 %v309, 127
        %v311 = vadd.s32 %v308, %v310
        %v312 = vld [vmem:[%s259] sm:$0xff]
        %s313 = sadd.s32 0, 8
        %s314 = scalar_lea.vmem %s259, %s313 [#allocation7]
        %v315 = vld [vmem:[%s314] sm:$0xff]
        %vm316 = vcmp.gt.f32.partialorder %v315, %v312
        %v317 = vsel %vm316, %v315, %v312
        %v318 = vsel %vm316, 1, 0
        %s319 = sadd.s32 0, 16
        %s320 = scalar_lea.vmem %s259, %s319 [#allocation7]
        %v321 = vld [vmem:[%s320] sm:$0xff]
        %vm322 = vcmp.gt.f32.partialorder %v321, %v317
        %v323 = vsel %vm322, %v321, %v317
        %v324 = vsel %vm322, 2, %v318
        %s325 = sadd.s32 0, 24
        %s326 = scalar_lea.vmem %s259, %s325 [#allocation7]
        %v327 = vld [vmem:[%s326] sm:$0xff]
        %vm328 = vcmp.gt.f32.partialorder %v327, %v323
        %v329 = vsel %vm328, 3, %v324
        %v330 = vld [vmem:[%s250] sm:$0xff]
        %s331 = scalar_lea.vmem %s250, %s313 [#allocation4]
        %v332 = vld [vmem:[%s331] sm:$0xff]
        %v333 = vmax.f32 %v330, %v332
        %s334 = scalar_lea.vmem %s250, %s319 [#allocation4]
        %v335 = vld [vmem:[%s334] sm:$0xff]
        %v336 = vmax.f32 %v333, %v335
        %s337 = scalar_lea.vmem %s250, %s325 [#allocation4]
        %v338 = vld [vmem:[%s337] sm:$0xff]
        %v339 = vmax.f32 %v336, %v338
        %v340 = vsub.f32 %v330, %v339
        %v341 = vmul.f32 %v340, 1.442695
        %v342 = vpow.pop %v341
        %v343 = vadd.f32 %v342, 0.0
        %vm344 = vcmp.eq.s32.totalorder %v329, 0
        %v345 = vsel %vm344, %v330, 0.0
        %s346 = sld [smem:[#allocation3]]
        %v347 = vstv %s346
        %v348 = vsel %vm344, %v347, 0.0
        %v349 = vsub.f32 %v332, %v339
        %v350 = vmul.f32 %v349, 1.442695
        %v351 = vpow.pop %v350
        %v352 = vadd.f32 %v343, %v351
        %vm353 = vcmp.eq.s32.totalorder %v329, 1
        %v354 = vsel %vm353, %v332, %v345
        %s355 = sld [smem:[#allocation3 + $0x1]]
        %v356 = vstv %s355
        %v357 = vsel %vm353, %v356, %v348
        %v358 = vsub.f32 %v335, %v339
        %v359 = vmul.f32 %v358, 1.442695
        %v360 = vpow.pop %v359
        %v361 = vadd.f32 %v352, %v360
        %vm362 = vcmp.eq.s32.totalorder %v329, 2
        %v363 = vsel %vm362, %v335, %v354
        %s364 = sld [smem:[#allocation3 + $0x2]]
        %v365 = vstv %s364
        %v366 = vsel %vm362, %v365, %v357
        %v367 = vsub.f32 %v338, %v339
        %v368 = vmul.f32 %v367, 1.442695
        %v369 = vpow.pop %v368
        %v370 = vadd.f32 %v361, %v369
        %vm371 = vcmp.eq.s32.totalorder %v329, 3
        %v372 = vsel %vm371, %v338, %v363
        %s373 = sld [smem:[#allocation3 + $0x3]]
        %v374 = vstv %s373
        %v375 = vsel %vm371, %v374, %v366
        %v376 = vlog2.pop %v370
        %v377 = vmul.f32 %v376, 0.6931472
        %v378 = vadd.f32 %v339, %v377
        %v379 = vsub.f32 %v378, %v372
        %s380 = smul.u32 0, 128
        %s381 = sadd.s32 %s305, %s380
        %v382 = vstv %s381
        %v383 = vadd.s32 %v382, %v311
        %vm384 = vcmp.lt.s32.totalorder %v383, 256
        %vm385 = vcmp.ne.s32.totalorder %v329, 255
        %vm386 = vmand %vm384, %vm385
        %v387 = vmul.f32 %v375, %v379
        %v388 = vsel %vm386, %v387, 0.0
        %v389 = vsel %vm386, %v375, 0.0
        %v390 = vld [vmem:[%s284] sm:$0xff]
        %v391 = vadd.f32 %v390, %v388
        %392 = vst [vmem:[%s284] sm:$0xff] %v391
        %v393 = vld [vmem:[%s291] sm:$0xff]
        %v394 = vadd.f32 %v393, %v389
        %395 = vst [vmem:[%s291] sm:$0xff] %v394
        %s396 = sand.u32 %s129, 1
        %s397 = scalar_lea.sflag [#allocation6], %s396
        %s398 = sand.u32 %s129, 1
        %s399 = smul.addr %s398, 8
        %s400 = scalar_lea.vmem [#allocation9], %s399
        %s401 = sand.u32 %s157, 1
        %s402 = scalar_lea.sflag [#allocation11], %s401
        %s403 = sand.u32 %s157, 1
        %s404 = smul.addr %s403, 8
        %s405 = scalar_lea.vmem [#allocation10], %s404
        // Predicated region
        $region41: #{tpu_custom_call.1} parent=27 // pred_check
          %p406 = pneg %p139
        $region42: #{tpu_custom_call.1} parent=27 // pred_check_branch
          %408 = sbr.rel (%p406) target = $region44
        $region43: #{tpu_custom_call.1} parent=27 // pred_region
          %s410 = ssub.s32 128, 128
          %411 = vsyncadd %s397, %s410
          %s412 = sadd.s32 %s38, %s37
          %s413 = smul.addr %s412, 128
          %s414 = scalar_lea.hbm %s3, %s413
          %s416 = sshll.u32 %s400, 4
          %s417 = int_to_ptr.vmem [resolvable:$true] %s416
          %419 = dma.vmem_to_hbm [thread:$0]  %s417, 128, %s414, %s397
        $region44: #{tpu_custom_call.1} parent=27 // pred_fallthru
          _
        // Predicated region
        $region45: #{tpu_custom_call.1} parent=27 // pred_check
          %p420 = pneg %p167
        $region46: #{tpu_custom_call.1} parent=27 // pred_check_branch
          %422 = sbr.rel (%p420) target = $region48
        $region47: #{tpu_custom_call.1} parent=27 // pred_region
          %s424 = ssub.s32 128, 128
          %425 = vsyncadd %s402, %s424
          %s426 = sadd.s32 %s38, %s37
          %s427 = smul.addr %s426, 128
          %s428 = scalar_lea.hbm %s4, %s427
          %s430 = sshll.u32 %s405, 4
          %s431 = int_to_ptr.vmem [resolvable:$true] %s430
          %433 = dma.vmem_to_hbm [thread:$0]  %s431, 128, %s428, %s402
        $region48: #{tpu_custom_call.1} parent=27 // pred_fallthru
          _
      $region28: #{tpu_custom_call.1} parent=5 // pred_fallthru
        _
      %p434 = scmp.le.s32.totalorder 2, %s27
      // Predicated region
      $region49: #{tpu_custom_call.1} parent=5 // pred_check
        %p435 = pneg %p434
      $region50: #{tpu_custom_call.1} parent=5 // pred_check_branch
        %437 = sbr.rel (%p435) target = $region52
      $region51: #{tpu_custom_call.1} parent=5 // pred_region
        %s438 = ssub.s32 %s27, 2
        // Predicated region
        $region53: #{tpu_custom_call.1} parent=51 // pred_check
          %p439 = pneg %p145
        $region54: #{tpu_custom_call.1} parent=51 // pred_check_branch
          %441 = sbr.rel (%p439) target = $region56
        $region55: #{tpu_custom_call.1} parent=51 // pred_region
          %s442 = sand.u32 %s130, 1
          %s443 = scalar_lea.sflag [#allocation6], %s442
          %s444 = sand.u32 %s130, 1
          %s445 = smul.addr %s444, 8
          %s446 = scalar_lea.vmem [#allocation9], %s445
          %447 = dma.done %s443, 128
        $region56: #{tpu_custom_call.1} parent=51 // pred_fallthru
          _
        // Predicated region
        $region57: #{tpu_custom_call.1} parent=51 // pred_check
          %p448 = pneg %p173
        $region58: #{tpu_custom_call.1} parent=51 // pred_check_branch
          %450 = sbr.rel (%p448) target = $region60
        $region59: #{tpu_custom_call.1} parent=51 // pred_region
          %s451 = sand.u32 %s158, 1
          %s452 = scalar_lea.sflag [#allocation11], %s451
          %s453 = sand.u32 %s158, 1
          %s454 = smul.addr %s453, 8
          %s455 = scalar_lea.vmem [#allocation10], %s454
          %456 = dma.done %s452, 128
        $region60: #{tpu_custom_call.1} parent=51 // pred_fallthru
          _
      $region52: #{tpu_custom_call.1} parent=5 // pred_fallthru
        _
    $region6: #{tpu_custom_call.1} parent=1 // loop_footer
      %s31 = sadd.s32 1, %s27
    $region7: #{tpu_custom_call.1} parent=1 // loop_footer_branch
      %26 = sbr.rel target = $region3
    $region8: #{tpu_custom_call.1} parent=1 // loop_exit
      _
    %457 = vsyncpa [#allocation5], 1
    %s458 = scalar_lea.sflag [#allocation5], 1
    %459 = vsyncpa %s458, 1
    %460 = vsyncpa [#allocation8], 1
    %s461 = scalar_lea.sflag [#allocation8], 1
    %462 = vsyncpa %s461, 1
    %463 = vsyncpa [#allocation6], 1
    %s464 = scalar_lea.sflag [#allocation6], 1
    %465 = vsyncpa %s464, 1
    %466 = vsyncpa [#allocation11], 1
    %s467 = scalar_lea.sflag [#allocation11], 1
    %468 = vsyncpa %s467, 1

</llo_original>
